<compile_context>
chip_gen: v7x
topology: tpu7x:2x2x1
jax: 0.10.0
libtpu: 0.0.40
codegen_flags: <defaults>
</compile_context>

<pallas_src>
import functools

import jax
import jax.numpy as jnp
from jax import lax
from jax.experimental import pallas as pl
from jax.experimental.pallas import tpu as pltpu


def _conv3x3(x, w_t, b, *, W, halo, left_ok, right_ok):
  """Channels-major 3x3 SAME conv.

  x    : (C_in, S)      activations, spatial flattened on lanes (S = H*W)
  w_t  : (C_out, 9*C_in) tap-major weights (row block k = dh*3 + dw)
  b    : (C_out, 1)
  returns (C_out, S) float32
  """
  C, S = x.shape
  zeros = jnp.zeros((C, halo), jnp.float32)
  # Lane-aligned zero halo on both sides (halo is a multiple of 128, so the
  # concatenation boundaries are vreg-tile aligned).
  xe = jnp.concatenate([zeros, x, zeros], axis=1)          # (C, S + 2*halo)

  pieces = []
  for k in range(9):
    dh, dw = divmod(k, 3)
    d = (dh - 1) * W + (dw - 1)                            # flat tap offset
    p = x if d == 0 else xe[:, halo + d:halo + d + S]      # lane-shifted window
    if dw == 0:                                            # needs w-1 >= 0
      p = jnp.where(left_ok, p, 0.0)
    elif dw == 2:                                          # needs w+1 <= W-1
      p = jnp.where(right_ok, p, 0.0)
    pieces.append(p)

  xcol = jnp.concatenate(pieces, axis=0)                   # (9*C_in, S) im2col
  return jnp.dot(w_t, xcol, preferred_element_type=jnp.float32) + b


def _cab_kernel(x_ref, w1_ref, b1_ref, w2_ref, b2_ref, fc1_ref, fc2t_ref,
                out_ref, *, H, W):
  # x_ref   : (C, S)       one image, channels-major, S = H*W on lanes
  # w1/w2   : (C, 9*C)     fused tap-major conv weights
  # b1/b2   : (C, 1)
  # fc1     : (C, Cr)      1x1 squeeze weight (Cin on sublanes)
  # fc2t    : (C, Cr)      1x1 excite weight, transposed (Cout on sublanes)
  # out_ref : (C, S)
  C, S = out_ref.shape
  halo = -(-(W + 1) // 128) * 128          # lane-aligned halo >= W + 1

  # Column-in-row index of every flat pixel (computed once on the VPU).
  col = lax.broadcasted_iota(jnp.int32, (1, S), 1)
  wpos = col % W
  left_ok = wpos >= 1
  right_ok = wpos <= W - 2

  conv = functools.partial(_conv3x3, W=W, halo=halo,
                           left_ok=left_ok, right_ok=right_ok)

  # conv1 -> ReLU -> conv2 : two fused MXU matmuls, intermediates stay in
  # registers/VMEM values (no padded scratch round-trip).
  h1 = jnp.maximum(conv(x_ref[...], w1_ref[...], b1_ref[...]), 0.0)
  y2 = conv(h1, w2_ref[...], b2_ref[...])

  # CALayer: global average pool -> 1x1 (C->Cr) -> ReLU -> 1x1 (Cr->C)
  # -> sigmoid -> channel-wise rescale.  Done with broadcasts + reductions
  # (VPU/XLU) and EUP sigmoid; no M=1 MXU pushes.
  gap = jnp.mean(y2, axis=1, keepdims=True)                           # (C, 1)
  z = jnp.maximum(jnp.sum(fc1_ref[...] * gap, axis=0, keepdims=True), 0.0)  # (1, Cr)
  scale = jax.nn.sigmoid(
      jnp.sum(fc2t_ref[...] * z, axis=1, keepdims=True))              # (C, 1)

  out_ref[...] = y2 * scale


@jax.jit
def cab_forward(x_nchw, w1, b1, w2, b2, fc1, fc2):
  """CAB forward.  x_nchw: (N, C, H, W) f32.
     w1, w2: (3, 3, C, C) HWIO;  b1, b2: (C,);  fc1: (C, C//4);  fc2: (C//4, C)."""
  N, C, H, W = x_nchw.shape
  S = H * W
  Cr = fc1.shape[1]

  # Metadata-only reshape of the input/output (no transpose / pad HBM passes).
  x3 = x_nchw.reshape(N, C, S)
  # Tiny one-off weight repacks.
  w1_t = jnp.transpose(w1.reshape(9 * C, C))      # (C_out, 9*C_in)
  w2_t = jnp.transpose(w2.reshape(9 * C, C))
  b1_c = b1.reshape(C, 1)
  b2_c = b2.reshape(C, 1)
  fc2_t = jnp.transpose(fc2)                      # (C, Cr)

  kernel = functools.partial(_cab_kernel, H=H, W=W)

  out = pl.pallas_call(
      kernel,
      out_shape=jax.ShapeDtypeStruct((N, C, S), jnp.float32),
      grid_spec=pltpu.PrefetchScalarGridSpec(
          num_scalar_prefetch=0,
          grid=(N,),
          in_specs=[
              pl.BlockSpec((pl.Squeezed(), C, S), lambda b: (b, 0, 0)),
              pl.BlockSpec((C, 9 * C), lambda b: (0, 0)),
              pl.BlockSpec((C, 1), lambda b: (0, 0)),
              pl.BlockSpec((C, 9 * C), lambda b: (0, 0)),
              pl.BlockSpec((C, 1), lambda b: (0, 0)),
              pl.BlockSpec((C, Cr), lambda b: (0, 0)),
              pl.BlockSpec((C, Cr), lambda b: (0, 0)),
          ],
          out_specs=pl.BlockSpec((pl.Squeezed(), C, S), lambda b: (b, 0, 0)),
      ),
      compiler_params=pltpu.CompilerParams(
          dimension_semantics=("parallel",)),
  )(x3, w1_t, b1_c, w2_t, b2_c, fc1, fc2_t)

  return out.reshape(N, C, H, W)


def cab_reference(x_nchw, w1, b1, w2, b2, fc1, fc2):
  """Pure-JAX reference (mirrors the PyTorch module)."""
  x = jnp.transpose(x_nchw, (0, 2, 3, 1))
  dn = ("NHWC", "HWIO", "NHWC")
  y = lax.conv_general_dilated(x, w1, (1, 1), "SAME",
                               dimension_numbers=dn) + b1[None, None, None, :]
  y = jax.nn.relu(y)
  y = lax.conv_general_dilated(y, w2, (1, 1), "SAME",
                               dimension_numbers=dn) + b2[None, None, None, :]
  s = jnp.mean(y, axis=(1, 2))                             # (N, C)
  s = jax.nn.relu(s @ fc1)
  s = jax.nn.sigmoid(s @ fc2)
  out = y * s[:, None, None, :]
  return jnp.transpose(out, (0, 3, 1, 2))


if __name__ == "__main__":
  N, C, H, W = 2, 8, 16, 16
  reduction = 4
  Cr = C // reduction

  key = jax.random.PRNGKey(0)
  kx, k1, kb1, k2, kb2, k3, k4 = jax.random.split(key, 7)

  x = jax.random.normal(kx, (N, C, H, W), jnp.float32)
  # Deterministic synthetic parameters (shapes match nn.Conv2d / CALayer).
  w1 = 0.1 * jax.random.normal(k1, (3, 3, C, C), jnp.float32)   # HWIO
  b1 = 0.1 * jax.random.normal(kb1, (C,), jnp.float32)
  w2 = 0.1 * jax.random.normal(k2, (3, 3, C, C), jnp.float32)   # HWIO
  b2 = 0.1 * jax.random.normal(kb2, (C,), jnp.float32)
  fc1 = 0.1 * jax.random.normal(k3, (C, Cr), jnp.float32)       # 1x1 conv C -> C//4 (no bias)
  fc2 = 0.1 * jax.random.normal(k4, (Cr, C), jnp.float32)       # 1x1 conv C//4 -> C (no bias)

  out = cab_forward(x, w1, b1, w2, b2, fc1, fc2)
  out = jax.block_until_ready(out)

  ref = cab_reference(x, w1, b1, w2, b2, fc1, fc2)
  assert out.shape == (N, C, H, W)
  assert jnp.allclose(out, ref, atol=1e-4, rtol=1e-4), (
      float(jnp.max(jnp.abs(out - ref))))

  print("KERNEL_OK")
</pallas_src>

<mosaic_0001>
module attributes {stable_mosaic.version = 11 : i64} {
  func.func @_cab_kernel(%arg0: i32, %arg1: memref<1x8x256xf32, #tpu.memory_space<vmem>>, %arg2: memref<8x72xf32, #tpu.memory_space<vmem>>, %arg3: memref<8x1xf32, #tpu.memory_space<vmem>>, %arg4: memref<8x72xf32, #tpu.memory_space<vmem>>, %arg5: memref<8x1xf32, #tpu.memory_space<vmem>>, %arg6: memref<8x2xf32, #tpu.memory_space<vmem>>, %arg7: memref<8x2xf32, #tpu.memory_space<vmem>>, %arg8: memref<1x8x256xf32, #tpu.memory_space<vmem>>) attributes {dimension_semantics = [#tpu.dimension_semantics<parallel>], iteration_bounds = array<i64: 2>, scalar_prefetch = 0 : i64, scratch_operands = 0 : i64, tpu.core_type = #tpu.core_type<tc>, window_params = [{transform_indices = @transform_0, window_bounds = array<i64: 1, 8, 256>}, {pipeline_mode = #tpu.pipeline_mode<synchronous>, transform_indices = @transform_1, window_bounds = array<i64: 8, 72>}, {pipeline_mode = #tpu.pipeline_mode<synchronous>, transform_indices = @transform_2, window_bounds = array<i64: 8, 1>}, {pipeline_mode = #tpu.pipeline_mode<synchronous>, transform_indices = @transform_3, window_bounds = array<i64: 8, 72>}, {pipeline_mode = #tpu.pipeline_mode<synchronous>, transform_indices = @transform_4, window_bounds = array<i64: 8, 1>}, {pipeline_mode = #tpu.pipeline_mode<synchronous>, transform_indices = @transform_5, window_bounds = array<i64: 8, 2>}, {pipeline_mode = #tpu.pipeline_mode<synchronous>, transform_indices = @transform_6, window_bounds = array<i64: 8, 2>}, {transform_indices = @transform_7, window_bounds = array<i64: 1, 8, 256>}]} {
    %0 = tpu.iota {dimensions = array<i32: 1>} : vector<1x256xi32>
    %c16_i32 = arith.constant 16 : i32
    %c0_i32 = arith.constant 0 : i32
    %1 = arith.cmpi eq, %c16_i32, %c0_i32 : i32
    %c1_i32 = arith.constant 1 : i32
    %2 = arith.select %1, %c1_i32, %c16_i32 : i32
    %3 = vector.broadcast %2 : i32 to vector<1x256xi32>
    %4 = arith.remsi %0, %3 : vector<1x256xi32>
    %c0_i32_0 = arith.constant 0 : i32
    %5 = vector.broadcast %c0_i32_0 : i32 to vector<1x256xi32>
    %6 = arith.cmpi ne, %4, %5 : vector<1x256xi32>
    %c0_i32_1 = arith.constant 0 : i32
    %7 = vector.broadcast %c0_i32_1 : i32 to vector<1x256xi32>
    %8 = arith.cmpi slt, %4, %7 : vector<1x256xi32>
    %c0_i32_2 = arith.constant 0 : i32
    %9 = arith.cmpi slt, %2, %c0_i32_2 : i32
    %10 = vector.broadcast %9 : i1 to vector<1x256xi1>
    %11 = vector.broadcast %10 : vector<1x256xi1> to vector<1x256xi1>
    %12 = arith.xori %8, %11 : vector<1x256xi1>
    %13 = arith.andi %12, %6 : vector<1x256xi1>
    %14 = vector.broadcast %2 : i32 to vector<1x256xi32>
    %15 = arith.addi %4, %14 : vector<1x256xi32>
    %16 = arith.select %13, %15, %4 : vector<1x256xi1>, vector<1x256xi32>
    %c1_i32_3 = arith.constant 1 : i32
    %17 = vector.broadcast %c1_i32_3 : i32 to vector<1x256xi32>
    %18 = arith.cmpi sge, %16, %17 : vector<1x256xi32>
    %c14_i32 = arith.constant 14 : i32
    %19 = vector.broadcast %c14_i32 : i32 to vector<1x256xi32>
    %20 = arith.cmpi sle, %16, %19 : vector<1x256xi32>
    %c0 = arith.constant 0 : index
    %c0_4 = arith.constant 0 : index
    %c0_5 = arith.constant 0 : index
    %21 = vector.load %arg1[%c0, %c0_4, %c0_5] : memref<1x8x256xf32, #tpu.memory_space<vmem>>, vector<1x8x256xf32>
    %22 = vector.shape_cast %21 : vector<1x8x256xf32> to vector<8x256xf32>
    %c0_6 = arith.constant 0 : index
    %c0_7 = arith.constant 0 : index
    %23 = vector.load %arg2[%c0_6, %c0_7] : memref<8x72xf32, #tpu.memory_space<vmem>>, vector<8x72xf32>
    %c0_8 = arith.constant 0 : index
    %c0_9 = arith.constant 0 : index
    %24 = vector.load %arg3[%c0_8, %c0_9] : memref<8x1xf32, #tpu.memory_space<vmem>>, vector<8x1xf32>
    %cst = arith.constant 0.000000e+00 : f32
    %25 = vector.broadcast %cst : f32 to vector<8x128xf32>
    %26 = tpu.concatenate %25, %22, %25 in 1 : vector<8x128xf32>, vector<8x256xf32>, vector<8x128xf32> -> vector<8x512xf32>
    %27 = vector.extract_strided_slice %26 {offsets = [0, 111], sizes = [8, 256], strides = [1, 1]} : vector<8x512xf32> to vector<8x256xf32>
    %cst_10 = arith.constant 0.000000e+00 : f32
    %28 = vector.shape_cast %18 : vector<1x256xi1> to vector<1x256xi1>
    %29 = vector.broadcast %28 : vector<1x256xi1> to vector<8x256xi1>
    %30 = vector.broadcast %cst_10 : f32 to vector<8x256xf32>
    %31 = arith.select %29, %27, %30 : vector<8x256xi1>, vector<8x256xf32>
    %32 = vector.extract_strided_slice %26 {offsets = [0, 112], sizes = [8, 256], strides = [1, 1]} : vector<8x512xf32> to vector<8x256xf32>
    %33 = vector.extract_strided_slice %26 {offsets = [0, 113], sizes = [8, 256], strides = [1, 1]} : vector<8x512xf32> to vector<8x256xf32>
    %cst_11 = arith.constant 0.000000e+00 : f32
    %34 = vector.shape_cast %20 : vector<1x256xi1> to vector<1x256xi1>
    %35 = vector.broadcast %34 : vector<1x256xi1> to vector<8x256xi1>
    %36 = vector.broadcast %cst_11 : f32 to vector<8x256xf32>
    %37 = arith.select %35, %33, %36 : vector<8x256xi1>, vector<8x256xf32>
    %38 = vector.extract_strided_slice %26 {offsets = [0, 127], sizes = [8, 256], strides = [1, 1]} : vector<8x512xf32> to vector<8x256xf32>
    %cst_12 = arith.constant 0.000000e+00 : f32
    %39 = vector.shape_cast %18 : vector<1x256xi1> to vector<1x256xi1>
    %40 = vector.broadcast %39 : vector<1x256xi1> to vector<8x256xi1>
    %41 = vector.broadcast %cst_12 : f32 to vector<8x256xf32>
    %42 = arith.select %40, %38, %41 : vector<8x256xi1>, vector<8x256xf32>
    %43 = vector.extract_strided_slice %26 {offsets = [0, 129], sizes = [8, 256], strides = [1, 1]} : vector<8x512xf32> to vector<8x256xf32>
    %cst_13 = arith.constant 0.000000e+00 : f32
    %44 = vector.shape_cast %20 : vector<1x256xi1> to vector<1x256xi1>
    %45 = vector.broadcast %44 : vector<1x256xi1> to vector<8x256xi1>
    %46 = vector.broadcast %cst_13 : f32 to vector<8x256xf32>
    %47 = arith.select %45, %43, %46 : vector<8x256xi1>, vector<8x256xf32>
    %48 = vector.extract_strided_slice %26 {offsets = [0, 143], sizes = [8, 256], strides = [1, 1]} : vector<8x512xf32> to vector<8x256xf32>
    %cst_14 = arith.constant 0.000000e+00 : f32
    %49 = vector.shape_cast %18 : vector<1x256xi1> to vector<1x256xi1>
    %50 = vector.broadcast %49 : vector<1x256xi1> to vector<8x256xi1>
    %51 = vector.broadcast %cst_14 : f32 to vector<8x256xf32>
    %52 = arith.select %50, %48, %51 : vector<8x256xi1>, vector<8x256xf32>
    %53 = vector.extract_strided_slice %26 {offsets = [0, 144], sizes = [8, 256], strides = [1, 1]} : vector<8x512xf32> to vector<8x256xf32>
    %54 = vector.extract_strided_slice %26 {offsets = [0, 145], sizes = [8, 256], strides = [1, 1]} : vector<8x512xf32> to vector<8x256xf32>
    %cst_15 = arith.constant 0.000000e+00 : f32
    %55 = vector.shape_cast %20 : vector<1x256xi1> to vector<1x256xi1>
    %56 = vector.broadcast %55 : vector<1x256xi1> to vector<8x256xi1>
    %57 = vector.broadcast %cst_15 : f32 to vector<8x256xf32>
    %58 = arith.select %56, %54, %57 : vector<8x256xi1>, vector<8x256xf32>
    %59 = tpu.concatenate %31, %32, %37, %42, %22, %47, %52, %53, %58 in 0 : vector<8x256xf32>, vector<8x256xf32>, vector<8x256xf32>, vector<8x256xf32>, vector<8x256xf32>, vector<8x256xf32>, vector<8x256xf32>, vector<8x256xf32>, vector<8x256xf32> -> vector<72x256xf32>
    %cst_16 = arith.constant dense<0.000000e+00> : vector<8x256xf32>
    %60 = tpu.matmul %23, %59, %cst_16 {dimension_numbers = #tpu.dot_dimension_numbers<[1], [0], [0], [1], [0, 0, 1, 1], [], []>} : vector<8x72xf32>, vector<72x256xf32>, vector<8x256xf32> -> vector<8x256xf32>
    %61 = vector.broadcast %24 : vector<8x1xf32> to vector<8x256xf32>
    %62 = arith.addf %60, %61 : vector<8x256xf32>
    %cst_17 = arith.constant 0.000000e+00 : f32
    %63 = vector.broadcast %cst_17 : f32 to vector<8x256xf32>
    %64 = arith.maximumf %62, %63 : vector<8x256xf32>
    %c0_18 = arith.constant 0 : index
    %c0_19 = arith.constant 0 : index
    %65 = vector.load %arg4[%c0_18, %c0_19] : memref<8x72xf32, #tpu.memory_space<vmem>>, vector<8x72xf32>
    %c0_20 = arith.constant 0 : index
    %c0_21 = arith.constant 0 : index
    %66 = vector.load %arg5[%c0_20, %c0_21] : memref<8x1xf32, #tpu.memory_space<vmem>>, vector<8x1xf32>
    %cst_22 = arith.constant 0.000000e+00 : f32
    %67 = vector.broadcast %cst_22 : f32 to vector<8x128xf32>
    %68 = tpu.concatenate %67, %64, %67 in 1 : vector<8x128xf32>, vector<8x256xf32>, vector<8x128xf32> -> vector<8x512xf32>
    %69 = vector.extract_strided_slice %68 {offsets = [0, 111], sizes = [8, 256], strides = [1, 1]} : vector<8x512xf32> to vector<8x256xf32>
    %cst_23 = arith.constant 0.000000e+00 : f32
    %70 = vector.shape_cast %18 : vector<1x256xi1> to vector<1x256xi1>
    %71 = vector.broadcast %70 : vector<1x256xi1> to vector<8x256xi1>
    %72 = vector.broadcast %cst_23 : f32 to vector<8x256xf32>
    %73 = arith.select %71, %69, %72 : vector<8x256xi1>, vector<8x256xf32>
    %74 = vector.extract_strided_slice %68 {offsets = [0, 112], sizes = [8, 256], strides = [1, 1]} : vector<8x512xf32> to vector<8x256xf32>
    %75 = vector.extract_strided_slice %68 {offsets = [0, 113], sizes = [8, 256], strides = [1, 1]} : vector<8x512xf32> to vector<8x256xf32>
    %cst_24 = arith.constant 0.000000e+00 : f32
    %76 = vector.shape_cast %20 : vector<1x256xi1> to vector<1x256xi1>
    %77 = vector.broadcast %76 : vector<1x256xi1> to vector<8x256xi1>
    %78 = vector.broadcast %cst_24 : f32 to vector<8x256xf32>
    %79 = arith.select %77, %75, %78 : vector<8x256xi1>, vector<8x256xf32>
    %80 = vector.extract_strided_slice %68 {offsets = [0, 127], sizes = [8, 256], strides = [1, 1]} : vector<8x512xf32> to vector<8x256xf32>
    %cst_25 = arith.constant 0.000000e+00 : f32
    %81 = vector.shape_cast %18 : vector<1x256xi1> to vector<1x256xi1>
    %82 = vector.broadcast %81 : vector<1x256xi1> to vector<8x256xi1>
    %83 = vector.broadcast %cst_25 : f32 to vector<8x256xf32>
    %84 = arith.select %82, %80, %83 : vector<8x256xi1>, vector<8x256xf32>
    %85 = vector.extract_strided_slice %68 {offsets = [0, 129], sizes = [8, 256], strides = [1, 1]} : vector<8x512xf32> to vector<8x256xf32>
    %cst_26 = arith.constant 0.000000e+00 : f32
    %86 = vector.shape_cast %20 : vector<1x256xi1> to vector<1x256xi1>
    %87 = vector.broadcast %86 : vector<1x256xi1> to vector<8x256xi1>
    %88 = vector.broadcast %cst_26 : f32 to vector<8x256xf32>
    %89 = arith.select %87, %85, %88 : vector<8x256xi1>, vector<8x256xf32>
    %90 = vector.extract_strided_slice %68 {offsets = [0, 143], sizes = [8, 256], strides = [1, 1]} : vector<8x512xf32> to vector<8x256xf32>
    %cst_27 = arith.constant 0.000000e+00 : f32
    %91 = vector.shape_cast %18 : vector<1x256xi1> to vector<1x256xi1>
    %92 = vector.broadcast %91 : vector<1x256xi1> to vector<8x256xi1>
    %93 = vector.broadcast %cst_27 : f32 to vector<8x256xf32>
    %94 = arith.select %92, %90, %93 : vector<8x256xi1>, vector<8x256xf32>
    %95 = vector.extract_strided_slice %68 {offsets = [0, 144], sizes = [8, 256], strides = [1, 1]} : vector<8x512xf32> to vector<8x256xf32>
    %96 = vector.extract_strided_slice %68 {offsets = [0, 145], sizes = [8, 256], strides = [1, 1]} : vector<8x512xf32> to vector<8x256xf32>
    %cst_28 = arith.constant 0.000000e+00 : f32
    %97 = vector.shape_cast %20 : vector<1x256xi1> to vector<1x256xi1>
    %98 = vector.broadcast %97 : vector<1x256xi1> to vector<8x256xi1>
    %99 = vector.broadcast %cst_28 : f32 to vector<8x256xf32>
    %100 = arith.select %98, %96, %99 : vector<8x256xi1>, vector<8x256xf32>
    %101 = tpu.concatenate %73, %74, %79, %84, %64, %89, %94, %95, %100 in 0 : vector<8x256xf32>, vector<8x256xf32>, vector<8x256xf32>, vector<8x256xf32>, vector<8x256xf32>, vector<8x256xf32>, vector<8x256xf32>, vector<8x256xf32>, vector<8x256xf32> -> vector<72x256xf32>
    %cst_29 = arith.constant dense<0.000000e+00> : vector<8x256xf32>
    %102 = tpu.matmul %65, %101, %cst_29 {dimension_numbers = #tpu.dot_dimension_numbers<[1], [0], [0], [1], [0, 0, 1, 1], [], []>} : vector<8x72xf32>, vector<72x256xf32>, vector<8x256xf32> -> vector<8x256xf32>
    %103 = vector.broadcast %66 : vector<8x1xf32> to vector<8x256xf32>
    %104 = arith.addf %102, %103 : vector<8x256xf32>
    %cst_30 = arith.constant dense<0.000000e+00> : vector<8xf32>
    %105 = vector.multi_reduction <add>, %104, %cst_30 [1] : vector<8x256xf32> to vector<8xf32>
    %106 = vector.shape_cast %105 : vector<8xf32> to vector<8x1xf32>
    %cst_31 = arith.constant 2.560000e+02 : f32
    %107 = vector.broadcast %cst_31 : f32 to vector<8x1xf32>
    %108 = arith.divf %106, %107 : vector<8x1xf32>
    %c0_32 = arith.constant 0 : index
    %c0_33 = arith.constant 0 : index
    %109 = vector.load %arg6[%c0_32, %c0_33] : memref<8x2xf32, #tpu.memory_space<vmem>>, vector<8x2xf32>
    %110 = vector.broadcast %108 : vector<8x1xf32> to vector<8x2xf32>
    %111 = arith.mulf %109, %110 : vector<8x2xf32>
    %cst_34 = arith.constant dense<0.000000e+00> : vector<2xf32>
    %112 = vector.multi_reduction <add>, %111, %cst_34 [0] : vector<8x2xf32> to vector<2xf32>
    %113 = vector.shape_cast %112 : vector<2xf32> to vector<1x2xf32>
    %cst_35 = arith.constant 0.000000e+00 : f32
    %114 = vector.broadcast %cst_35 : f32 to vector<1x2xf32>
    %115 = arith.maximumf %113, %114 : vector<1x2xf32>
    %c0_36 = arith.constant 0 : index
    %c0_37 = arith.constant 0 : index
    %116 = vector.load %arg7[%c0_36, %c0_37] : memref<8x2xf32, #tpu.memory_space<vmem>>, vector<8x2xf32>
    %117 = vector.broadcast %115 : vector<1x2xf32> to vector<8x2xf32>
    %118 = arith.mulf %116, %117 : vector<8x2xf32>
    %cst_38 = arith.constant dense<0.000000e+00> : vector<8xf32>
    %119 = vector.multi_reduction <add>, %118, %cst_38 [1] : vector<8x2xf32> to vector<8xf32>
    %120 = vector.shape_cast %119 : vector<8xf32> to vector<8x1xf32>
    %121 = arith.negf %120 : vector<8x1xf32>
    %122 = math.exp %121 : vector<8x1xf32>
    %cst_39 = arith.constant 1.000000e+00 : f32
    %123 = vector.broadcast %cst_39 : f32 to vector<8x1xf32>
    %124 = arith.addf %123, %122 : vector<8x1xf32>
    %125 = arith.divf %123, %124 : vector<8x1xf32>
    %126 = vector.broadcast %125 : vector<8x1xf32> to vector<8x256xf32>
    %127 = arith.mulf %104, %126 : vector<8x256xf32>
    %c0_40 = arith.constant 0 : index
    %c0_41 = arith.constant 0 : index
    %c0_42 = arith.constant 0 : index
    %128 = vector.load %arg8[%c0_40, %c0_41, %c0_42] : memref<1x8x256xf32, #tpu.memory_space<vmem>>, vector<1x8x256xf32>
    %129 = vector.shape_cast %128 : vector<1x8x256xf32> to vector<8x256xf32>
    %130 = vector.shape_cast %127 : vector<8x256xf32> to vector<1x8x256xf32>
    tpu.vector_store %arg8[%c0_40, %c0_41, %c0_42], %130 {strides = array<i32>} : memref<1x8x256xf32, #tpu.memory_space<vmem>>, vector<1x8x256xf32>,
    return
  }
  func.func @transform_0(%arg0: i32) -> (i32, i32, i32) {
    %c0_i32 = arith.constant 0 : i32
    %c0_i32_0 = arith.constant 0 : i32
    %c0_i32_1 = arith.constant 0 : i32
    return %arg0, %c0_i32, %c0_i32_0 : i32, i32, i32
  }
  func.func @transform_1(%arg0: i32) -> (i32, i32) {
    %c0_i32 = arith.constant 0 : i32
    %c0_i32_0 = arith.constant 0 : i32
    %c0_i32_1 = arith.constant 0 : i32
    return %c0_i32, %c0_i32_0 : i32, i32
  }
  func.func @transform_2(%arg0: i32) -> (i32, i32) {
    %c0_i32 = arith.constant 0 : i32
    %c0_i32_0 = arith.constant 0 : i32
    %c0_i32_1 = arith.constant 0 : i32
    return %c0_i32, %c0_i32_0 : i32, i32
  }
  func.func @transform_3(%arg0: i32) -> (i32, i32) {
    %c0_i32 = arith.constant 0 : i32
    %c0_i32_0 = arith.constant 0 : i32
    %c0_i32_1 = arith.constant 0 : i32
    return %c0_i32, %c0_i32_0 : i32, i32
  }
  func.func @transform_4(%arg0: i32) -> (i32, i32) {
    %c0_i32 = arith.constant 0 : i32
    %c0_i32_0 = arith.constant 0 : i32
    %c0_i32_1 = arith.constant 0 : i32
    return %c0_i32, %c0_i32_0 : i32, i32
  }
  func.func @transform_5(%arg0: i32) -> (i32, i32) {
    %c0_i32 = arith.constant 0 : i32
    %c0_i32_0 = arith.constant 0 : i32
    %c0_i32_1 = arith.constant 0 : i32
    return %c0_i32, %c0_i32_0 : i32, i32
  }
  func.func @transform_6(%arg0: i32) -> (i32, i32) {
    %c0_i32 = arith.constant 0 : i32
    %c0_i32_0 = arith.constant 0 : i32
    %c0_i32_1 = arith.constant 0 : i32
    return %c0_i32, %c0_i32_0 : i32, i32
  }
  func.func @transform_7(%arg0: i32) -> (i32, i32, i32) {
    %c0_i32 = arith.constant 0 : i32
    %c0_i32_0 = arith.constant 0 : i32
    %c0_i32_1 = arith.constant 0 : i32
    return %arg0, %c0_i32, %c0_i32_0 : i32, i32, i32
  }
}

</mosaic_0001>

<llo_original>
// kernel: cab_forward.1
$region0: #{cab_forward.1}
  #allocation0 [shape = 'u32[]', space=smem, size = 0x4, offset = 0x4, fixed_abs, tag = 'smem constant byte address 0x4 - core index']
  #allocation1 [shape = 'u32[144,128]{1,0:T(1,128)}', space=vmem, size = 0x12000, scoped, tag = 'internal scratch']
  %s0 = inlined_call_operand.vmem [shape: f32[2,8,256], index: 0, kind: input, shape index: {}]
  %s1 = inlined_call_operand.vmem [shape: f32[8,72], index: 1, kind: input, shape index: {}]
  %s2 = inlined_call_operand.vmem [shape: f32[8,1], index: 2, kind: input, shape index: {}]
  %s3 = inlined_call_operand.vmem [shape: f32[8,72], index: 3, kind: input, shape index: {}]
  %s4 = inlined_call_operand.vmem [shape: f32[8,1], index: 4, kind: input, shape index: {}]
  %s5 = inlined_call_operand.vmem [shape: f32[8,2], index: 5, kind: input, shape index: {}]
  %s6 = inlined_call_operand.vmem [shape: f32[8,2], index: 6, kind: input, shape index: {}]
  %s7 = inlined_call_operand.vmem [shape: f32[2,8,256], index: 7, kind: output, shape index: {}]
  %s8 = sld [smem:[#allocation0]]
  $region61: #{cab_forward.1} parent=0
    _
  %s10 = ssub.s32 1, %s8
  %s11 = scalar_select 0, %s10, %s8
  loop: start=0, step=1, limit=4
  $region2: #{cab_forward.1} parent=0 // loop_pre_header
    _
  $region3: #{cab_forward.1} parent=0 // loop_header
    %s13 = sphi 0, %s17
    %p14 = scmp.ge.s32.totalorder %s13, 4
    %s23 = sphi 0, %s25
    %s26 = sphi 0, %s23
    %s27 = sphi 0, %s26
    %s43 = sphi 0, %s27
    %s47 = sphi 0, %s47
    %s49 = sphi 0, %s47
    %s50 = sphi 0, %s49
    %s64 = sphi 0, %s50
    %s68 = sphi 0, %s68
    %s70 = sphi 0, %s68
    %s71 = sphi 0, %s70
    %s85 = sphi 0, %s71
    %s89 = sphi 0, %s89
    %s91 = sphi 0, %s89
    %s92 = sphi 0, %s91
    %s106 = sphi 0, %s92
    %s110 = sphi 0, %s110
    %s112 = sphi 0, %s110
    %s113 = sphi 0, %s112
    %s127 = sphi 0, %s113
    %s131 = sphi 0, %s131
    %s133 = sphi 0, %s131
    %s134 = sphi 0, %s133
    %s148 = sphi 0, %s134
    %s152 = sphi 0, %s152
    %s154 = sphi 0, %s152
    %s155 = sphi 0, %s154
    %s169 = sphi 0, %s155
    %s175 = sphi 0, %s177
    %s178 = sphi 0, %s175
    %s179 = sphi 0, %s178
    %s195 = sphi 0, %s179
  $region4: #{cab_forward.1} parent=0 // loop_header_branch
    %16 = sbr.rel (%p14) target = $region8
  $region5: #{cab_forward.1} parent=0 // loop_body
    %s18 = ssub.s32 %s13, 1
    %s19 = ssub.s32 %s13, 2
    %s20 = sadd.s32 %s13, 1
    %s21 = ssub.s32 %s13, %s20
    %p22 = scmp.eq.s32.totalorder %s21, 0
    %s24 = sadd.s32 %s23, 1
    %s25 = scalar_select %p22, %s23, %s24
    %p28 = pneg %p22
    %p29 = scmp.eq.s32.totalorder %s13, 1
    %p30 = por %p28, %p29
    %p31 = scmp.ne.s32.totalorder %s23, %s26
    %p32 = scmp.eq.s32.totalorder %s13, 0
    %p33 = por %p31, %p32
    %p34 = scmp.ne.s32.totalorder %s23, %s26
    %p35 = scmp.eq.s32.totalorder %s18, 1
    %p36 = por %p34, %p35
    %p37 = scmp.ne.s32.totalorder %s26, %s27
    %p38 = scmp.eq.s32.totalorder %s18, 0
    %p39 = por %p37, %p38
    %p40 = scmp.ne.s32.totalorder %s26, %s27
    %p41 = scmp.eq.s32.totalorder %s19, 1
    %p42 = por %p40, %p41
    %p44 = scmp.ne.s32.totalorder %s27, %s43
    %p45 = scmp.eq.s32.totalorder %s19, 0
    %p46 = por %p44, %p45
    %s48 = sadd.s32 %s47, 1
    %p51 = scmp.eq.s32.totalorder %s13, 1
    %p52 = scmp.ne.s32.totalorder %s47, %s49
    %p53 = scmp.eq.s32.totalorder %s13, 0
    %p54 = por %p52, %p53
    %p55 = scmp.ne.s32.totalorder %s47, %s49
    %p56 = scmp.eq.s32.totalorder %s18, 1
    %p57 = por %p55, %p56
    %p58 = scmp.ne.s32.totalorder %s49, %s50
    %p59 = scmp.eq.s32.totalorder %s18, 0
    %p60 = por %p58, %p59
    %p61 = scmp.ne.s32.totalorder %s49, %s50
    %p62 = scmp.eq.s32.totalorder %s19, 1
    %p63 = por %p61, %p62
    %p65 = scmp.ne.s32.totalorder %s50, %s64
    %p66 = scmp.eq.s32.totalorder %s19, 0
    %p67 = por %p65, %p66
    %s69 = sadd.s32 %s68, 1
    %p72 = scmp.eq.s32.totalorder %s13, 1
    %p73 = scmp.ne.s32.totalorder %s68, %s70
    %p74 = scmp.eq.s32.totalorder %s13, 0
    %p75 = por %p73, %p74
    %p76 = scmp.ne.s32.totalorder %s68, %s70
    %p77 = scmp.eq.s32.totalorder %s18, 1
    %p78 = por %p76, %p77
    %p79 = scmp.ne.s32.totalorder %s70, %s71
    %p80 = scmp.eq.s32.totalorder %s18, 0
    %p81 = por %p79, %p80
    %p82 = scmp.ne.s32.totalorder %s70, %s71
    %p83 = scmp.eq.s32.totalorder %s19, 1
    %p84 = por %p82, %p83
    %p86 = scmp.ne.s32.totalorder %s71, %s85
    %p87 = scmp.eq.s32.totalorder %s19, 0
    %p88 = por %p86, %p87
    %s90 = sadd.s32 %s89, 1
    %p93 = scmp.eq.s32.totalorder %s13, 1
    %p94 = scmp.ne.s32.totalorder %s89, %s91
    %p95 = scmp.eq.s32.totalorder %s13, 0
    %p96 = por %p94, %p95
    %p97 = scmp.ne.s32.totalorder %s89, %s91
    %p98 = scmp.eq.s32.totalorder %s18, 1
    %p99 = por %p97, %p98
    %p100 = scmp.ne.s32.totalorder %s91, %s92
    %p101 = scmp.eq.s32.totalorder %s18, 0
    %p102 = por %p100, %p101
    %p103 = scmp.ne.s32.totalorder %s91, %s92
    %p104 = scmp.eq.s32.totalorder %s19, 1
    %p105 = por %p103, %p104
    %p107 = scmp.ne.s32.totalorder %s92, %s106
    %p108 = scmp.eq.s32.totalorder %s19, 0
    %p109 = por %p107, %p108
    %s111 = sadd.s32 %s110, 1
    %p114 = scmp.eq.s32.totalorder %s13, 1
    %p115 = scmp.ne.s32.totalorder %s110, %s112
    %p116 = scmp.eq.s32.totalorder %s13, 0
    %p117 = por %p115, %p116
    %p118 = scmp.ne.s32.totalorder %s110, %s112
    %p119 = scmp.eq.s32.totalorder %s18, 1
    %p120 = por %p118, %p119
    %p121 = scmp.ne.s32.totalorder %s112, %s113
    %p122 = scmp.eq.s32.totalorder %s18, 0
    %p123 = por %p121, %p122
    %p124 = scmp.ne.s32.totalorder %s112, %s113
    %p125 = scmp.eq.s32.totalorder %s19, 1
    %p126 = por %p124, %p125
    %p128 = scmp.ne.s32.totalorder %s113, %s127
    %p129 = scmp.eq.s32.totalorder %s19, 0
    %p130 = por %p128, %p129
    %s132 = sadd.s32 %s131, 1
    %p135 = scmp.eq.s32.totalorder %s13, 1
    %p136 = scmp.ne.s32.totalorder %s131, %s133
    %p137 = scmp.eq.s32.totalorder %s13, 0
    %p138 = por %p136, %p137
    %p139 = scmp.ne.s32.totalorder %s131, %s133
    %p140 = scmp.eq.s32.totalorder %s18, 1
    %p141 = por %p139, %p140
    %p142 = scmp.ne.s32.totalorder %s133, %s134
    %p143 = scmp.eq.s32.totalorder %s18, 0
    %p144 = por %p142, %p143
    %p145 = scmp.ne.s32.totalorder %s133, %s134
    %p146 = scmp.eq.s32.totalorder %s19, 1
    %p147 = por %p145, %p146
    %p149 = scmp.ne.s32.totalorder %s134, %s148
    %p150 = scmp.eq.s32.totalorder %s19, 0
    %p151 = por %p149, %p150
    %s153 = sadd.s32 %s152, 1
    %p156 = scmp.eq.s32.totalorder %s13, 1
    %p157 = scmp.ne.s32.totalorder %s152, %s154
    %p158 = scmp.eq.s32.totalorder %s13, 0
    %p159 = por %p157, %p158
    %p160 = scmp.ne.s32.totalorder %s152, %s154
    %p161 = scmp.eq.s32.totalorder %s18, 1
    %p162 = por %p160, %p161
    %p163 = scmp.ne.s32.totalorder %s154, %s155
    %p164 = scmp.eq.s32.totalorder %s18, 0
    %p165 = por %p163, %p164
    %p166 = scmp.ne.s32.totalorder %s154, %s155
    %p167 = scmp.eq.s32.totalorder %s19, 1
    %p168 = por %p166, %p167
    %p170 = scmp.ne.s32.totalorder %s155, %s169
    %p171 = scmp.eq.s32.totalorder %s19, 0
    %p172 = por %p170, %p171
    %s173 = ssub.s32 %s13, %s20
    %p174 = scmp.eq.s32.totalorder %s173, 0
    %s176 = sadd.s32 %s175, 1
    %s177 = scalar_select %p174, %s175, %s176
    %p180 = pneg %p174
    %p181 = scmp.eq.s32.totalorder %s13, 1
    %p182 = por %p180, %p181
    %p183 = scmp.ne.s32.totalorder %s175, %s178
    %p184 = scmp.eq.s32.totalorder %s13, 0
    %p185 = por %p183, %p184
    %p186 = scmp.ne.s32.totalorder %s175, %s178
    %p187 = scmp.eq.s32.totalorder %s18, 1
    %p188 = por %p186, %p187
    %p189 = scmp.ne.s32.totalorder %s178, %s179
    %p190 = scmp.eq.s32.totalorder %s18, 0
    %p191 = por %p189, %p190
    %p192 = scmp.ne.s32.totalorder %s178, %s179
    %p193 = scmp.eq.s32.totalorder %s19, 1
    %p194 = por %p192, %p193
    %p196 = scmp.ne.s32.totalorder %s179, %s195
    %p197 = scmp.eq.s32.totalorder %s19, 0
    %p198 = por %p196, %p197
    %p199 = scmp.le.s32.totalorder 1, %s13
    %p200 = scmp.lt.s32.totalorder %s13, 3
    %p201 = pnand %p199, %p200
    %p202 = pneg %p201
    // Predicated region
    $region9: #{cab_forward.1} parent=5 // pred_check
      _
    $region10: #{cab_forward.1} parent=5 // pred_check_branch
      %204 = sbr.rel (%p201) target = $region12
    $region11: #{cab_forward.1} parent=5 // pred_region
      %s205 = ssub.s32 %s13, 1
      // Predicated region
      $region13: #{cab_forward.1} parent=11 // pred_check
        %p206 = pneg %p60
      $region14: #{cab_forward.1} parent=11 // pred_check_branch
        %208 = sbr.rel (%p206) target = $region16
      $region15: #{cab_forward.1} parent=11 // pred_region
        _
      $region16: #{cab_forward.1} parent=11 // pred_fallthru
        _
      // Predicated region
      $region17: #{cab_forward.1} parent=11 // pred_check
        %p209 = pneg %p81
      $region18: #{cab_forward.1} parent=11 // pred_check_branch
        %211 = sbr.rel (%p209) target = $region20
      $region19: #{cab_forward.1} parent=11 // pred_region
        _
      $region20: #{cab_forward.1} parent=11 // pred_fallthru
        _
      // Predicated region
      $region21: #{cab_forward.1} parent=11 // pred_check
        %p212 = pneg %p102
      $region22: #{cab_forward.1} parent=11 // pred_check_branch
        %214 = sbr.rel (%p212) target = $region24
      $region23: #{cab_forward.1} parent=11 // pred_region
        _
      $region24: #{cab_forward.1} parent=11 // pred_fallthru
        _
      // Predicated region
      $region25: #{cab_forward.1} parent=11 // pred_check
        %p215 = pneg %p123
      $region26: #{cab_forward.1} parent=11 // pred_check_branch
        %217 = sbr.rel (%p215) target = $region28
      $region27: #{cab_forward.1} parent=11 // pred_region
        _
      $region28: #{cab_forward.1} parent=11 // pred_fallthru
        _
      // Predicated region
      $region29: #{cab_forward.1} parent=11 // pred_check
        %p218 = pneg %p144
      $region30: #{cab_forward.1} parent=11 // pred_check_branch
        %220 = sbr.rel (%p218) target = $region32
      $region31: #{cab_forward.1} parent=11 // pred_region
        _
      $region32: #{cab_forward.1} parent=11 // pred_fallthru
        _
      // Predicated region
      $region33: #{cab_forward.1} parent=11 // pred_check
        %p221 = pneg %p165
      $region34: #{cab_forward.1} parent=11 // pred_check_branch
        %223 = sbr.rel (%p221) target = $region36
      $region35: #{cab_forward.1} parent=11 // pred_region
        _
      $region36: #{cab_forward.1} parent=11 // pred_fallthru
        _
    $region12: #{cab_forward.1} parent=5 // pred_fallthru
      _
    %p224 = scmp.lt.s32.totalorder %s13, 2
    // Predicated region
    $region37: #{cab_forward.1} parent=5 // pred_check
      %p225 = pneg %p224
    $region38: #{cab_forward.1} parent=5 // pred_check_branch
      %227 = sbr.rel (%p225) target = $region40
    $region39: #{cab_forward.1} parent=5 // pred_region
      // Predicated region
      $region41: #{cab_forward.1} parent=39 // pred_check
        %p228 = pneg %p33
      $region42: #{cab_forward.1} parent=39 // pred_check_branch
        %230 = sbr.rel (%p228) target = $region44
      $region43: #{cab_forward.1} parent=39 // pred_region
        %p231 = scmp.lt.s32.totalorder %s13, 1
        %s232 = scalar_select %p231, %s13, 1
        %s233 = smul.addr %s232, 2
        %s234 = smul.addr %s233, 8
        %s235 = scalar_lea.vmem %s0, %s234
      $region44: #{cab_forward.1} parent=39 // pred_fallthru
        _
    $region40: #{cab_forward.1} parent=5 // pred_fallthru
      _
    %p236 = scmp.le.s32.totalorder 1, %s13
    %p237 = scmp.lt.s32.totalorder %s13, 3
    %p238 = pnand %p236, %p237
    %p239 = pneg %p238
    // Predicated region
    $region45: #{cab_forward.1} parent=5 // pred_check
      _
    $region46: #{cab_forward.1} parent=5 // pred_check_branch
      %241 = sbr.rel (%p238) target = $region48
    $region47: #{cab_forward.1} parent=5 // pred_region
      %s242 = ssub.s32 %s13, 1
      %p243 = scmp.lt.s32.totalorder %s18, 1
      %s244 = scalar_select %p243, %s18, 1
      %s245 = smul.addr %s244, 2
      %s246 = smul.addr %s245, 8
      %s247 = scalar_lea.vmem %s0, %s246
      %p248 = pneg %p39
      %p249 = pneg %p36
      %p250 = pneg %p60
      %p251 = pneg %p57
      %p252 = pneg %p81
      %p253 = pneg %p78
      %p254 = pneg %p102
      %p255 = pneg %p99
      %p256 = pneg %p123
      %p257 = pneg %p120
      %p258 = pneg %p144
      %p259 = pneg %p141
      %p260 = pneg %p165
      %p261 = pneg %p162
      %p262 = pneg %p191
      %p263 = pneg %p188
      %p264 = scmp.lt.s32.totalorder %s18, 1
      %s265 = scalar_select %p264, %s18, 1
      %s266 = smul.addr %s265, 2
      %s267 = smul.addr %s266, 8
      %s268 = scalar_lea.vmem %s7, %s267
      %p269 = scmp.lt.s32.totalorder %s18, 1
      %s270 = scalar_select %p269, %s18, 1
      %s271 = smul.addr %s270, 2
      %s272 = smul.addr %s271, 8
      %s273 = scalar_lea.vmem %s0, %s272
      %p274 = scmp.lt.s32.totalorder %s18, 1
      %s275 = scalar_select %p274, %s18, 1
      %s276 = smul.addr %s275, 2
      %s277 = smul.addr %s276, 8
      %s278 = scalar_lea.vmem %s7, %s277
      %v279 = vlaneseq
      %v280 = vand.u32 %v279, 127
      %v281 = vadd.s32 %v280, 128
      %vm282 = vcmp.lt.s32.totalorder %v280, 0
      %v283 = vsub.s32 0, %v280
      %v284 = vsel %vm282, %v283, %v280
      %v285 = vshrl.u32 %v284, 4
      %v286 = vand.u32 %v284, 15
      %v287 = vsub.s32 0, %v286
      %v288 = vsel %vm282, %v287, %v286
      %vm289 = vcmp.lt.s32.totalorder %v281, 0
      %v290 = vsub.s32 0, %v281
      %v291 = vsel %vm289, %v290, %v281
      %v292 = vshrl.u32 %v291, 4
      %v293 = vand.u32 %v291, 15
      %v294 = vsub.s32 0, %v293
      %v295 = vsel %vm289, %v294, %v293
      %vm296 = vcmp.ne.s32.totalorder %v288, 0
      %vm297 = vcmp.ne.s32.totalorder %v295, 0
      %vm298 = vcmp.lt.s32.totalorder %v288, 0
      %vm299 = vcmp.lt.s32.totalorder %v295, 0
      %vm300 = vmand %vm298, %vm296
      %vm301 = vmand %vm299, %vm297
      %v302 = vadd.s32 %v288, 16
      %v303 = vadd.s32 %v295, 16
      %v304 = vsel %vm300, %v302, %v288
      %v305 = vsel %vm301, %v303, %v295
      %vm306 = vcmp.ge.s32.totalorder %v304, 1
      %vm307 = vcmp.ge.s32.totalorder %v305, 1
      %vm308 = vcmp.le.s32.totalorder %v304, 14
      %vm309 = vcmp.le.s32.totalorder %v305, 14
      %v310 = vld [vmem:[%s273] sm:$0xff]
      %v311 = vld [vmem:[%s273 + $0x8] sm:$0xff]
      %v312 = vld [vmem:[%s1] sm:$0xff]
      %v313 = vld [vmem:[%s2] sm:$0xff]
      %v314 = vsel %vm306, 1, 0
      %v315 = vsel %vm307, 1, 0
      %vm316 = vcmp.eq.s32.totalorder %v314, 1
      %vm317 = vcmp.eq.s32.totalorder %v315, 1
      %321 = vrot.lane.b32.xlu0 0.0, 17
      %v322 = vpop.permute.xlu0 %321
      %323 = vrot.lane.b32.xlu0 %v310, 17
      %v324 = vpop.permute.xlu0 %323
      %325 = vrot.lane.b32.xlu0 %v311, 17
      %v326 = vpop.permute.xlu0 %325
      %vm327 = vcmask 138240
      %v328 = vsel %vm327, %v322, %v324
      %v329 = vsel %vm327, %v324, %v326
      %v332 = vsel %vm316, %v328, 0.0
      %v333 = vsel %vm317, %v329, 0.0
      %v334 = vsel %vm308, 1, 0
      %v335 = vsel %vm309, 1, 0
      %vm336 = vcmp.eq.s32.totalorder %v334, 1
      %vm337 = vcmp.eq.s32.totalorder %v335, 1
      %338 = vrot.lane.b32.xlu0 0.0, 15
      %v339 = vpop.permute.xlu0 %338
      %340 = vrot.lane.b32.xlu0 %v310, 15
      %v341 = vpop.permute.xlu0 %340
      %342 = vrot.lane.b32.xlu0 %v311, 15
      %v343 = vpop.permute.xlu0 %342
      %vm344 = vcmask 121856
      %v345 = vsel %vm344, %v339, %v341
      %v346 = vsel %vm344, %v341, %v343
      %v349 = vsel %vm336, %v345, 0.0
      %v350 = vsel %vm337, %v346, 0.0
      %351 = vrot.lane.b32.xlu0 0.0, 1
      %v352 = vpop.permute.xlu0 %351
      %353 = vrot.lane.b32.xlu0 %v310, 1
      %v354 = vpop.permute.xlu0 %353
      %355 = vrot.lane.b32.xlu0 %v311, 1
      %v356 = vpop.permute.xlu0 %355
      %vm357 = vcmask 7168
      %v358 = vsel %vm357, %v352, %v354
      %v359 = vsel %vm357, %v354, %v356
      %v362 = vsel %vm316, %v358, 0.0
      %v363 = vsel %vm317, %v359, 0.0
      %364 = vrot.lane.b32.xlu0 %v310, 127
      %v365 = vpop.permute.xlu0 %364
      %366 = vrot.lane.b32.xlu0 %v311, 127
      %v367 = vpop.permute.xlu0 %366
      %368 = vrot.lane.b32.xlu0 0.0, 127
      %v369 = vpop.permute.xlu0 %368
      %vm370 = vcmask 1039360
      %v371 = vsel %vm370, %v365, %v367
      %v372 = vsel %vm370, %v367, %v369
      %v375 = vsel %vm336, %v371, 0.0
      %v376 = vsel %vm337, %v372, 0.0
      %377 = vrot.lane.b32.xlu0 %v310, 113
      %v378 = vpop.permute.xlu0 %377
      %379 = vrot.lane.b32.xlu0 %v311, 113
      %v380 = vpop.permute.xlu0 %379
      %381 = vrot.lane.b32.xlu0 0.0, 113
      %v382 = vpop.permute.xlu0 %381
      %vm383 = vcmask 924672
      %v384 = vsel %vm383, %v378, %v380
      %v385 = vsel %vm383, %v380, %v382
      %v388 = vsel %vm316, %v384, 0.0
      %v389 = vsel %vm317, %v385, 0.0
      %390 = vrot.lane.b32.xlu0 %v310, 111
      %v391 = vpop.permute.xlu0 %390
      %392 = vrot.lane.b32.xlu0 %v311, 111
      %v393 = vpop.permute.xlu0 %392
      %394 = vrot.lane.b32.xlu0 0.0, 111
      %v395 = vpop.permute.xlu0 %394
      %vm396 = vcmask 908288
      %v397 = vsel %vm396, %v391, %v393
      %v398 = vsel %vm396, %v393, %v395
      %v401 = vsel %vm336, %v397, 0.0
      %v402 = vsel %vm337, %v398, 0.0
      %403 = vrot.lane.b32.xlu0 0.0, 16
      %v404 = vpop.permute.xlu0 %403
      %405 = vrot.lane.b32.xlu0 %v310, 16
      %v406 = vpop.permute.xlu0 %405
      %407 = vrot.lane.b32.xlu0 %v311, 16
      %v408 = vpop.permute.xlu0 %407
      %vm409 = vcmask 130048
      %v410 = vsel %vm409, %v404, %v406
      %v411 = vsel %vm409, %v406, %v408
      %414 = vrot.lane.b32.xlu0 %v310, 112
      %v415 = vpop.permute.xlu0 %414
      %416 = vrot.lane.b32.xlu0 %v311, 112
      %v417 = vpop.permute.xlu0 %416
      %418 = vrot.lane.b32.xlu0 0.0, 112
      %v419 = vpop.permute.xlu0 %418
      %vm420 = vcmask 916480
      %v421 = vsel %vm420, %v415, %v417
      %v422 = vsel %vm420, %v417, %v419
      %426 = vset.pattern.permute.xlu0 0
      %427 = vperm.xlu0 %426, %v313
      %v428 = vpop.permute.xlu0 %427
      %vm430 = vcmask 588800
      %v432 = vsel %vm430, %v312, 0
      %434 = vmatprep.subr.mxu0 %v333
      %435 = vmatpush1.msra.mxu0 %v332
      %436 = vmatprep.subr.mxu0 %v411
      %437 = vmatpush1.msra.mxu0 %v410
      %438 = vmatprep.subr.mxu0 %v350
      %439 = vmatpush1.msra.mxu0 %v349
      %440 = vmatprep.subr.mxu0 %v363
      %441 = vmatpush1.msra.mxu0 %v362
      %442 = vmatprep.subr.mxu0 %v311
      %443 = vmatpush1.msra.mxu0 %v310
      %444 = vmatprep.subr.mxu0 %v376
      %445 = vmatpush1.msra.mxu0 %v375
      %446 = vmatprep.subr.mxu0 %v389
      %447 = vmatpush1.msra.mxu0 %v388
      %448 = vmatprep.subr.mxu0 %v422
      %449 = vmatpush1.msra.mxu0 %v421
      %450 = vmatprep.subr.mxu0 %v402
      %451 = vmatpush1.msra.mxu0 %v401
      %452 = vmatprep.subr.mxu0 0.0
      %453 = vmatpush1.msra.mxu0 0.0
      %454 = vmatprep.subr.mxu0 0.0
      %455 = vmatpush1.msra.mxu0 0.0
      %456 = vmatprep.subr.mxu0 0.0
      %457 = vmatpush1.msra.mxu0 0.0
      %458 = vmatprep.subr.mxu0 0.0
      %459 = vmatpush1.msra.mxu0 0.0
      %460 = vmatprep.subr.mxu0 0.0
      %461 = vmatpush1.msra.mxu0 0.0
      %462 = vmatprep.subr.mxu0 0.0
      %463 = vmatpush1.msra.mxu0 0.0
      %464 = vmatprep.subr.mxu0 0.0
      %465 = vmatpush1.msra.mxu0 0.0
      %466 = vmatprep.subr.mxu0 0.0
      %467 = vmatpush1.msra.mxu0 0.0
      %468 = vmatprep.subr.mxu0 0.0
      %469 = vmatpush1.msra.mxu0 0.0
      %470 = vmatprep.subr.mxu0 0.0
      %471 = vmatpush1.msra.mxu0 0.0
      %472 = vmatprep.subr.mxu0 0.0
      %473 = vmatpush1.msra.mxu0 0.0
      %474 = vmatprep.subr.mxu0 0.0
      %475 = vmatpush1.msra.mxu0 0.0
      %476 = vmatprep.subr.mxu0 0.0
      %477 = vmatpush1.msra.mxu0 0.0
      %478 = vmatprep.subr.mxu0 0.0
      %479 = vmatpush1.msra.mxu0 0.0
      %480 = vmatprep.subr.mxu0 0.0
      %481 = vmatpush1.msra.mxu0 0.0
      %482 = vmatprep.subr.mxu0 0.0
      %483 = vmatpush1.msra.mxu0 0.0
      %484 = vmatprep.subr.mxu0 0.0
      %485 = vmatpush1.msra.mxu0 0.0
      %486 = vmatprep.subr.mxu0 0.0
      %487 = vmatpush1.msra.mxu0 0.0
      %488 = vmatprep.subr.mxu0 0.0
      %489 = vmatpush1.msra.mxu0 0.0
      %490 = vmatprep.subr.mxu0 0.0
      %491 = vmatpush1.msra.mxu0 0.0
      %492 = vmatprep.subr.mxu0 0.0
      %493 = vmatpush1.msra.mxu0 0.0
      %494 = vmatprep.subr.mxu0 0.0
      %495 = vmatpush1.msra.mxu0 0.0
      %496 = vmatprep.subr.mxu0 0.0
      %497 = vmatpush1.msra.mxu0 0.0
      %498 = vmatprep.mubr.f32.mxu0 0.0
      %499 = vmatmul.mubr.f32.gmra.mrb[0].mxu0 %v432
      %v500 = vpop.f32.mrb[0].mxu0
      %v501 = vadd.f32 %v428, %v500
      %v502 = vpop.f32.mrb[0].mxu0
      %v503 = vadd.f32 %v428, %v502
      %504 = vdwg.mxu0
      %v505 = vmax.f32 %v501, 0.0
      %v506 = vmax.f32 %v503, 0.0
      %v507 = vld [vmem:[%s3] sm:$0xff]
      %v508 = vld [vmem:[%s4] sm:$0xff]
      %511 = vrot.lane.b32.xlu0 %v505, 17
      %v512 = vpop.permute.xlu0 %511
      %513 = vrot.lane.b32.xlu0 %v506, 17
      %v514 = vpop.permute.xlu0 %513
      %v515 = vsel %vm327, %v322, %v512
      %v516 = vsel %vm327, %v512, %v514
      %v519 = vsel %vm316, %v515, 0.0
      %v520 = vsel %vm317, %v516, 0.0
      %521 = vrot.lane.b32.xlu0 %v505, 15
      %v522 = vpop.permute.xlu0 %521
      %523 = vrot.lane.b32.xlu0 %v506, 15
      %v524 = vpop.permute.xlu0 %523
      %v525 = vsel %vm344, %v339, %v522
      %v526 = vsel %vm344, %v522, %v524
      %v529 = vsel %vm336, %v525, 0.0
      %v530 = vsel %vm337, %v526, 0.0
      %531 = vrot.lane.b32.xlu0 %v505, 1
      %v532 = vpop.permute.xlu0 %531
      %533 = vrot.lane.b32.xlu0 %v506, 1
      %v534 = vpop.permute.xlu0 %533
      %v535 = vsel %vm357, %v352, %v532
      %v536 = vsel %vm357, %v532, %v534
      %v539 = vsel %vm316, %v535, 0.0
      %v540 = vsel %vm317, %v536, 0.0
      %541 = vrot.lane.b32.xlu0 %v505, 127
      %v542 = vpop.permute.xlu0 %541
      %543 = vrot.lane.b32.xlu0 %v506, 127
      %v544 = vpop.permute.xlu0 %543
      %v545 = vsel %vm370, %v542, %v544
      %v546 = vsel %vm370, %v544, %v369
      %v549 = vsel %vm336, %v545, 0.0
      %v550 = vsel %vm337, %v546, 0.0
      %551 = vrot.lane.b32.xlu0 %v505, 113
      %v552 = vpop.permute.xlu0 %551
      %553 = vrot.lane.b32.xlu0 %v506, 113
      %v554 = vpop.permute.xlu0 %553
      %v555 = vsel %vm383, %v552, %v554
      %v556 = vsel %vm383, %v554, %v382
      %v559 = vsel %vm316, %v555, 0.0
      %v560 = vsel %vm317, %v556, 0.0
      %561 = vrot.lane.b32.xlu0 %v505, 111
      %v562 = vpop.permute.xlu0 %561
      %563 = vrot.lane.b32.xlu0 %v506, 111
      %v564 = vpop.permute.xlu0 %563
      %v565 = vsel %vm396, %v562, %v564
      %v566 = vsel %vm396, %v564, %v395
      %v569 = vsel %vm336, %v565, 0.0
      %v570 = vsel %vm337, %v566, 0.0
      %571 = vrot.lane.b32.xlu0 %v505, 16
      %v572 = vpop.permute.xlu0 %571
      %573 = vrot.lane.b32.xlu0 %v506, 16
      %v574 = vpop.permute.xlu0 %573
      %v575 = vsel %vm409, %v404, %v572
      %v576 = vsel %vm409, %v572, %v574
      %579 = vrot.lane.b32.xlu0 %v505, 112
      %v580 = vpop.permute.xlu0 %579
      %581 = vrot.lane.b32.xlu0 %v506, 112
      %v582 = vpop.permute.xlu0 %581
      %v583 = vsel %vm420, %v580, %v582
      %v584 = vsel %vm420, %v582, %v419
      %588 = vset.pattern.permute.xlu0 0
      %589 = vperm.xlu0 %588, %v508
      %v590 = vpop.permute.xlu0 %589
      %v593 = vsel %vm430, %v507, 0
      %595 = vmatprep.subr.mxu0 %v520
      %596 = vmatpush1.msra.mxu0 %v519
      %597 = vmatprep.subr.mxu0 %v576
      %598 = vmatpush1.msra.mxu0 %v575
      %599 = vmatprep.subr.mxu0 %v530
      %600 = vmatpush1.msra.mxu0 %v529
      %601 = vmatprep.subr.mxu0 %v540
      %602 = vmatpush1.msra.mxu0 %v539
      %603 = vmatprep.subr.mxu0 %v506
      %604 = vmatpush1.msra.mxu0 %v505
      %605 = vmatprep.subr.mxu0 %v550
      %606 = vmatpush1.msra.mxu0 %v549
      %607 = vmatprep.subr.mxu0 %v560
      %608 = vmatpush1.msra.mxu0 %v559
      %609 = vmatprep.subr.mxu0 %v584
      %610 = vmatpush1.msra.mxu0 %v583
      %611 = vmatprep.subr.mxu0 %v570
      %612 = vmatpush1.msra.mxu0 %v569
      %613 = vmatprep.subr.mxu0 0.0
      %614 = vmatpush1.msra.mxu0 0.0
      %615 = vmatprep.subr.mxu0 0.0
      %616 = vmatpush1.msra.mxu0 0.0
      %617 = vmatprep.subr.mxu0 0.0
      %618 = vmatpush1.msra.mxu0 0.0
      %619 = vmatprep.subr.mxu0 0.0
      %620 = vmatpush1.msra.mxu0 0.0
      %621 = vmatprep.subr.mxu0 0.0
      %622 = vmatpush1.msra.mxu0 0.0
      %623 = vmatprep.subr.mxu0 0.0
      %624 = vmatpush1.msra.mxu0 0.0
      %625 = vmatprep.subr.mxu0 0.0
      %626 = vmatpush1.msra.mxu0 0.0
      %627 = vmatprep.subr.mxu0 0.0
      %628 = vmatpush1.msra.mxu0 0.0
      %629 = vmatprep.subr.mxu0 0.0
      %630 = vmatpush1.msra.mxu0 0.0
      %631 = vmatprep.subr.mxu0 0.0
      %632 = vmatpush1.msra.mxu0 0.0
      %633 = vmatprep.subr.mxu0 0.0
      %634 = vmatpush1.msra.mxu0 0.0
      %635 = vmatprep.subr.mxu0 0.0
      %636 = vmatpush1.msra.mxu0 0.0
      %637 = vmatprep.subr.mxu0 0.0
      %638 = vmatpush1.msra.mxu0 0.0
      %639 = vmatprep.subr.mxu0 0.0
      %640 = vmatpush1.msra.mxu0 0.0
      %641 = vmatprep.subr.mxu0 0.0
      %642 = vmatpush1.msra.mxu0 0.0
      %643 = vmatprep.subr.mxu0 0.0
      %644 = vmatpush1.msra.mxu0 0.0
      %645 = vmatprep.subr.mxu0 0.0
      %646 = vmatpush1.msra.mxu0 0.0
      %647 = vmatprep.subr.mxu0 0.0
      %648 = vmatpush1.msra.mxu0 0.0
      %649 = vmatprep.subr.mxu0 0.0
      %650 = vmatpush1.msra.mxu0 0.0
      %651 = vmatprep.subr.mxu0 0.0
      %652 = vmatpush1.msra.mxu0 0.0
      %653 = vmatprep.subr.mxu0 0.0
      %654 = vmatpush1.msra.mxu0 0.0
      %655 = vmatprep.subr.mxu0 0.0
      %656 = vmatpush1.msra.mxu0 0.0
      %657 = vmatprep.subr.mxu0 0.0
      %658 = vmatpush1.msra.mxu0 0.0
      %659 = vmatprep.mubr.f32.mxu0 0.0
      %660 = vmatmul.mubr.f32.gmra.mrb[0].mxu0 %v593
      %v661 = vpop.f32.mrb[0].mxu0
      %v662 = vadd.f32 %v590, %v661
      %v663 = vpop.f32.mrb[0].mxu0
      %v664 = vadd.f32 %v590, %v663
      %665 = vdwg.mxu0
      %v666 = vadd.f32 %v662, %v664
      %667 = vadd.xlane.f32.xlu0 %v666
      %v668 = vpop.xlane.xlu0 %667
      %v669 = vrcp.pop 256.0
      %v670 = vmul.f32 %v668, %v669
      %v671 = vld [vmem:[%s5] sm:$0xff]
      %v672 = vmul.f32 %v671, %v670
      %vm673 = vcmask 15360
      %v674 = vsel %vm673, %v672, 0.0
      %v675 = vrot.slane %v674, 4
      %v676 = vadd.f32 %v674, %v675
      %v677 = vrot.slane %v676, 2
      %v678 = vadd.f32 %v676, %v677
      %v679 = vrot.slane %v678, 1
      %v680 = vadd.f32 %v678, %v679
      %v681 = vmax.f32 %v680, 0.0
      %v682 = vld [vmem:[%s6] sm:$0xff]
      %v683 = vmul.f32 %v682, %v681
      %v684 = vsel %vm673, %v683, 0.0
      %685 = vadd.xlane.f32.xlu0 %v684
      %v686 = vpop.xlane.xlu0 %685
      %v687 = vxor.u32 %v686, 2147483648
      %v688 = vmul.f32 %v687, 1.442695
      %v689 = vpow.pop %v688
      %v690 = vadd.f32 %v689, 1.0
      %v691 = vrcp.pop %v690
      %v692 = vmul.f32 1.0, %v691
      %v693 = vmul.f32 %v662, %v692
      %v694 = vmul.f32 %v664, %v692
      %695 = vst [vmem:[%s278] sm:$0xff] %v693
      %696 = vst [vmem:[%s278 + $0x8] sm:$0xff] %v694
      %p697 = scmp.lt.s32.totalorder %s18, 1
      %s698 = scalar_select %p697, %s18, 1
      %s699 = smul.addr %s698, 2
      %s700 = smul.addr %s699, 8
      %s701 = scalar_lea.vmem %s7, %s700
      // Predicated region
      $region49: #{cab_forward.1} parent=47 // pred_check
        %p702 = pneg %p188
      $region50: #{cab_forward.1} parent=47 // pred_check_branch
        %704 = sbr.rel (%p702) target = $region52
      $region51: #{cab_forward.1} parent=47 // pred_region
        _
      $region52: #{cab_forward.1} parent=47 // pred_fallthru
        _
    $region48: #{cab_forward.1} parent=5 // pred_fallthru
      _
    %p705 = scmp.le.s32.totalorder 2, %s13
    // Predicated region
    $region53: #{cab_forward.1} parent=5 // pred_check
      %p706 = pneg %p705
    $region54: #{cab_forward.1} parent=5 // pred_check_branch
      %708 = sbr.rel (%p706) target = $region56
    $region55: #{cab_forward.1} parent=5 // pred_region
      %s709 = ssub.s32 %s13, 2
      // Predicated region
      $region57: #{cab_forward.1} parent=55 // pred_check
        %p710 = pneg %p194
      $region58: #{cab_forward.1} parent=55 // pred_check_branch
        %712 = sbr.rel (%p710) target = $region60
      $region59: #{cab_forward.1} parent=55 // pred_region
        %p713 = scmp.lt.s32.totalorder %s19, 1
        %s714 = scalar_select %p713, %s19, 1
        %s715 = smul.addr %s714, 2
        %s716 = smul.addr %s715, 8
        %s717 = scalar_lea.vmem %s7, %s716
      $region60: #{cab_forward.1} parent=55 // pred_fallthru
        _
    $region56: #{cab_forward.1} parent=5 // pred_fallthru
      _
  $region6: #{cab_forward.1} parent=0 // loop_footer
    %s17 = sadd.s32 1, %s13
  $region7: #{cab_forward.1} parent=0 // loop_footer_branch
    %12 = sbr.rel target = $region3
  $region8: #{cab_forward.1} parent=0 // loop_exit
    _

</llo_original>
